<compile_context>
chip_gen: v6e
topology: v6e:2x2x1
jax: 0.10.0
libtpu: 0.0.40
codegen_flags: <defaults>
</compile_context>

<pallas_src>
import jax
import jax.numpy as jnp
from jax.experimental import pallas as pl
from jax.experimental.pallas import tpu as pltpu


def _outconv_kernel(w_ref, b_ref, x_ref, o_ref):
    """1x1 conv on dense (sublane, lane) spatial slabs.

    w_ref: SMEM [Cout, Cin] (f32)     b_ref: SMEM [Cout] (f32)
    x_ref: VMEM [Bn, Cin, R, 128]     o_ref: VMEM [Bn, Cout, R, 128]
    """
    bn, cin = x_ref.shape[0], x_ref.shape[1]
    cout = o_ref.shape[1]
    for bi in range(bn):                           # static unroll (Bn small)
        accs = [None] * cout
        # Channel-outer: read each input-channel slab from the ref once,
        # FMA it into all Cout accumulators.  Slabs are dense [R,128].
        for c in range(cin):
            xc = x_ref[bi, c, :, :].astype(jnp.float32)   # per-slab load + cast
            for o in range(cout):
                term = w_ref[o, c] * xc
                accs[o] = term if accs[o] is None else accs[o] + term
        for o in range(cout):
            # Bias folded in as a scalar add at store time (no full-tile broadcast).
            o_ref[bi, o, :, :] = (accs[o] + b_ref[o]).astype(o_ref.dtype)


def outconv_pallas(x_nchw, weight, bias, *, max_rows=512):
    """OutConv.forward: y = Conv2d(in, out, kernel_size=1)(x).

    x_nchw:  [N, Cin, H, W]
    weight:  [Cout, Cin, 1, 1]   (PyTorch layout)
    bias:    [Cout]
    returns: [N, Cout, H, W]  (same dtype as x)
    """
    n, cin, h, w = x_nchw.shape
    cout = weight.shape[0]
    hw = h * w
    lanes = 128

    # Tiny parameters -> 32-bit scalars in SMEM.
    w2 = weight.reshape(cout, cin).astype(jnp.float32)
    b1 = bias.reshape(cout).astype(jnp.float32)

    # Dense spatial layout: view HW as (rows, 128 lanes).  Pad HW with zeros to
    # a multiple of 128; the op is purely elementwise over space, so padded
    # lanes never contaminate valid lanes, and they are sliced off at the end.
    hw_pad = pl.cdiv(hw, lanes) * lanes
    x3d = x_nchw.reshape(n, cin, hw)
    if hw_pad != hw:
        x3d = jnp.pad(x3d, ((0, 0), (0, 0), (0, hw_pad - hw)))
    rtot = hw_pad // lanes
    x4 = x3d.reshape(n, cin, rtot, lanes)

    # ---- tile selection ------------------------------------------------------
    itemsize = jnp.dtype(x_nchw.dtype).itemsize
    # Cap the input block around ~1 MiB (double-buffered in+out stays a few MiB,
    # well inside v7x's 64 MiB VMEM).  Rows per block: multiple of 8 or full extent.
    r_cap = max(8, min(max_rows, (1 << 20) // max(1, cin * lanes * itemsize)))
    r_cap = max(8, (r_cap // 8) * 8)
    r = rtot if rtot <= r_cap else r_cap            # tail spatial block is masked

    # Small feature maps: block several images per grid step so per-step
    # overhead (~0.35us) is amortized.
    bn = max(1, min(n, r_cap // max(1, r)))

    # v7x: 2 TensorCores share 'parallel' grid axes -> ensure >= 2 grid steps
    # whenever the problem can be split.
    if pl.cdiv(n, bn) * pl.cdiv(rtot, r) < 2:
        if n >= 2:
            bn = pl.cdiv(n, 2)
        elif rtot >= 9:
            r = pl.cdiv(pl.cdiv(rtot, 2), 8) * 8    # half the rows, rounded up to 8

    grid = (pl.cdiv(n, bn), pl.cdiv(rtot, r))

    y4 = pl.pallas_call(
        _outconv_kernel,
        out_shape=jax.ShapeDtypeStruct((n, cout, rtot, lanes), x_nchw.dtype),
        grid_spec=pltpu.PrefetchScalarGridSpec(
            num_scalar_prefetch=0,
            grid=grid,
            in_specs=[
                pl.BlockSpec(memory_space=pltpu.MemorySpace.SMEM),    # weight
                pl.BlockSpec(memory_space=pltpu.MemorySpace.SMEM),    # bias
                pl.BlockSpec((bn, cin, r, lanes), lambda b, s: (b, 0, s, 0)),
            ],
            out_specs=pl.BlockSpec((bn, cout, r, lanes), lambda b, s: (b, 0, s, 0)),
        ),
        compiler_params=pltpu.CompilerParams(
            dimension_semantics=("parallel", "parallel"),
        ),
    )(w2, b1, x4)

    y3 = y4.reshape(n, cout, hw_pad)
    if hw_pad != hw:
        y3 = y3[:, :, :hw]
    return y3.reshape(n, cout, h, w)


def _reference(x, weight, bias):
    cout, cin = weight.shape[0], weight.shape[1]
    return (jnp.einsum("nchw,oc->nohw", x, weight.reshape(cout, cin))
            + bias[None, :, None, None])


if __name__ == "__main__":
    key = jax.random.PRNGKey(0)
    kx, kw, kb, kx2, kx3 = jax.random.split(key, 5)

    N, CIN, COUT, H, W = 2, 4, 3, 16, 16

    x = jax.random.normal(kx, (N, CIN, H, W), dtype=jnp.float32)
    # Deterministic "init" mimicking nn.Conv2d default uniform bound 1/sqrt(fan_in)
    bound = 1.0 / jnp.sqrt(jnp.float32(CIN * 1 * 1))
    weight = jax.random.uniform(kw, (COUT, CIN, 1, 1), jnp.float32, -bound, bound)
    bias = jax.random.uniform(kb, (COUT,), jnp.float32, -bound, bound)

    y = outconv_pallas(x, weight, bias)
    jax.block_until_ready(y)
    assert y.shape == (N, COUT, H, W)
    assert jnp.allclose(y, _reference(x, weight, bias), atol=1e-5), "mismatch vs reference"

    # Spatial size not a multiple of the lane width (exercises the zero-pad path).
    x_odd = jax.random.normal(kx2, (N, CIN, 10, 10), dtype=jnp.float32)
    y_odd = outconv_pallas(x_odd, weight, bias)
    jax.block_until_ready(y_odd)
    assert y_odd.shape == (N, COUT, 10, 10)
    assert jnp.allclose(y_odd, _reference(x_odd, weight, bias), atol=1e-5), "odd-shape mismatch"

    # Single image with multiple spatial blocks (exercises the masked spatial
    # tail block and the v7x >=2-step grid split).
    x_big = jax.random.normal(kx3, (1, CIN, 96, 96), dtype=jnp.float32)
    y_big = outconv_pallas(x_big, weight, bias)
    jax.block_until_ready(y_big)
    assert y_big.shape == (1, COUT, 96, 96)
    assert jnp.allclose(y_big, _reference(x_big, weight, bias), atol=1e-5), "tiled-shape mismatch"

    print("KERNEL_OK")
</pallas_src>

<mosaic_0001>
module attributes {stable_mosaic.version = 11 : i64} {
  func.func @_outconv_kernel(%arg0: i32, %arg1: i32, %arg2: memref<3x4xf32, #tpu.memory_space<smem>>, %arg3: memref<3xf32, #tpu.memory_space<smem>>, %arg4: memref<1x4x2x128xf32, #tpu.memory_space<vmem>>, %arg5: memref<1x3x2x128xf32, #tpu.memory_space<vmem>>) attributes {dimension_semantics = [#tpu.dimension_semantics<parallel>, #tpu.dimension_semantics<parallel>], iteration_bounds = array<i64: 2, 1>, scalar_prefetch = 0 : i64, scratch_operands = 0 : i64, tpu.core_type = #tpu.core_type<tc>, window_params = [{transform_indices = @transform_0, window_bounds = array<i64: 3, 4>}, {transform_indices = @transform_1, window_bounds = array<i64: 3>}, {transform_indices = @transform_2, window_bounds = array<i64: 1, 4, 2, 128>}, {transform_indices = @transform_3, window_bounds = array<i64: 1, 3, 2, 128>}]} {
    %c0 = arith.constant 0 : index
    %c0_0 = arith.constant 0 : index
    %c0_1 = arith.constant 0 : index
    %c0_2 = arith.constant 0 : index
    %0 = vector.load %arg4[%c0, %c0_0, %c0_1, %c0_2] : memref<1x4x2x128xf32, #tpu.memory_space<vmem>>, vector<1x1x2x128xf32>
    %1 = vector.shape_cast %0 : vector<1x1x2x128xf32> to vector<2x128xf32>
    %c0_3 = arith.constant 0 : index
    %c0_4 = arith.constant 0 : index
    %2 = memref.load %arg2[%c0_3, %c0_4] : memref<3x4xf32, #tpu.memory_space<smem>>
    %3 = vector.broadcast %2 : f32 to vector<2x128xf32>
    %4 = arith.mulf %3, %1 : vector<2x128xf32>
    %c1 = arith.constant 1 : index
    %c0_5 = arith.constant 0 : index
    %5 = memref.load %arg2[%c1, %c0_5] : memref<3x4xf32, #tpu.memory_space<smem>>
    %6 = vector.broadcast %5 : f32 to vector<2x128xf32>
    %7 = arith.mulf %6, %1 : vector<2x128xf32>
    %c2 = arith.constant 2 : index
    %c0_6 = arith.constant 0 : index
    %8 = memref.load %arg2[%c2, %c0_6] : memref<3x4xf32, #tpu.memory_space<smem>>
    %9 = vector.broadcast %8 : f32 to vector<2x128xf32>
    %10 = arith.mulf %9, %1 : vector<2x128xf32>
    %c0_7 = arith.constant 0 : index
    %c1_8 = arith.constant 1 : index
    %c0_9 = arith.constant 0 : index
    %c0_10 = arith.constant 0 : index
    %11 = vector.load %arg4[%c0_7, %c1_8, %c0_9, %c0_10] : memref<1x4x2x128xf32, #tpu.memory_space<vmem>>, vector<1x1x2x128xf32>
    %12 = vector.shape_cast %11 : vector<1x1x2x128xf32> to vector<2x128xf32>
    %c0_11 = arith.constant 0 : index
    %c1_12 = arith.constant 1 : index
    %13 = memref.load %arg2[%c0_11, %c1_12] : memref<3x4xf32, #tpu.memory_space<smem>>
    %14 = vector.broadcast %13 : f32 to vector<2x128xf32>
    %15 = arith.mulf %14, %12 : vector<2x128xf32>
    %16 = arith.addf %4, %15 : vector<2x128xf32>
    %c1_13 = arith.constant 1 : index
    %c1_14 = arith.constant 1 : index
    %17 = memref.load %arg2[%c1_13, %c1_14] : memref<3x4xf32, #tpu.memory_space<smem>>
    %18 = vector.broadcast %17 : f32 to vector<2x128xf32>
    %19 = arith.mulf %18, %12 : vector<2x128xf32>
    %20 = arith.addf %7, %19 : vector<2x128xf32>
    %c2_15 = arith.constant 2 : index
    %c1_16 = arith.constant 1 : index
    %21 = memref.load %arg2[%c2_15, %c1_16] : memref<3x4xf32, #tpu.memory_space<smem>>
    %22 = vector.broadcast %21 : f32 to vector<2x128xf32>
    %23 = arith.mulf %22, %12 : vector<2x128xf32>
    %24 = arith.addf %10, %23 : vector<2x128xf32>
    %c0_17 = arith.constant 0 : index
    %c2_18 = arith.constant 2 : index
    %c0_19 = arith.constant 0 : index
    %c0_20 = arith.constant 0 : index
    %25 = vector.load %arg4[%c0_17, %c2_18, %c0_19, %c0_20] : memref<1x4x2x128xf32, #tpu.memory_space<vmem>>, vector<1x1x2x128xf32>
    %26 = vector.shape_cast %25 : vector<1x1x2x128xf32> to vector<2x128xf32>
    %c0_21 = arith.constant 0 : index
    %c2_22 = arith.constant 2 : index
    %27 = memref.load %arg2[%c0_21, %c2_22] : memref<3x4xf32, #tpu.memory_space<smem>>
    %28 = vector.broadcast %27 : f32 to vector<2x128xf32>
    %29 = arith.mulf %28, %26 : vector<2x128xf32>
    %30 = arith.addf %16, %29 : vector<2x128xf32>
    %c1_23 = arith.constant 1 : index
    %c2_24 = arith.constant 2 : index
    %31 = memref.load %arg2[%c1_23, %c2_24] : memref<3x4xf32, #tpu.memory_space<smem>>
    %32 = vector.broadcast %31 : f32 to vector<2x128xf32>
    %33 = arith.mulf %32, %26 : vector<2x128xf32>
    %34 = arith.addf %20, %33 : vector<2x128xf32>
    %c2_25 = arith.constant 2 : index
    %c2_26 = arith.constant 2 : index
    %35 = memref.load %arg2[%c2_25, %c2_26] : memref<3x4xf32, #tpu.memory_space<smem>>
    %36 = vector.broadcast %35 : f32 to vector<2x128xf32>
    %37 = arith.mulf %36, %26 : vector<2x128xf32>
    %38 = arith.addf %24, %37 : vector<2x128xf32>
    %c0_27 = arith.constant 0 : index
    %c3 = arith.constant 3 : index
    %c0_28 = arith.constant 0 : index
    %c0_29 = arith.constant 0 : index
    %39 = vector.load %arg4[%c0_27, %c3, %c0_28, %c0_29] : memref<1x4x2x128xf32, #tpu.memory_space<vmem>>, vector<1x1x2x128xf32>
    %40 = vector.shape_cast %39 : vector<1x1x2x128xf32> to vector<2x128xf32>
    %c0_30 = arith.constant 0 : index
    %c3_31 = arith.constant 3 : index
    %41 = memref.load %arg2[%c0_30, %c3_31] : memref<3x4xf32, #tpu.memory_space<smem>>
    %42 = vector.broadcast %41 : f32 to vector<2x128xf32>
    %43 = arith.mulf %42, %40 : vector<2x128xf32>
    %44 = arith.addf %30, %43 : vector<2x128xf32>
    %c1_32 = arith.constant 1 : index
    %c3_33 = arith.constant 3 : index
    %45 = memref.load %arg2[%c1_32, %c3_33] : memref<3x4xf32, #tpu.memory_space<smem>>
    %46 = vector.broadcast %45 : f32 to vector<2x128xf32>
    %47 = arith.mulf %46, %40 : vector<2x128xf32>
    %48 = arith.addf %34, %47 : vector<2x128xf32>
    %c2_34 = arith.constant 2 : index
    %c3_35 = arith.constant 3 : index
    %49 = memref.load %arg2[%c2_34, %c3_35] : memref<3x4xf32, #tpu.memory_space<smem>>
    %50 = vector.broadcast %49 : f32 to vector<2x128xf32>
    %51 = arith.mulf %50, %40 : vector<2x128xf32>
    %52 = arith.addf %38, %51 : vector<2x128xf32>
    %c0_36 = arith.constant 0 : index
    %53 = memref.load %arg3[%c0_36] : memref<3xf32, #tpu.memory_space<smem>>
    %54 = vector.broadcast %53 : f32 to vector<2x128xf32>
    %55 = arith.addf %44, %54 : vector<2x128xf32>
    %c0_37 = arith.constant 0 : index
    %c0_38 = arith.constant 0 : index
    %c0_39 = arith.constant 0 : index
    %c0_40 = arith.constant 0 : index
    %56 = vector.load %arg5[%c0_37, %c0_38, %c0_39, %c0_40] : memref<1x3x2x128xf32, #tpu.memory_space<vmem>>, vector<1x1x2x128xf32>
    %57 = vector.shape_cast %56 : vector<1x1x2x128xf32> to vector<2x128xf32>
    %58 = vector.shape_cast %55 : vector<2x128xf32> to vector<1x1x2x128xf32>
    tpu.vector_store %arg5[%c0_37, %c0_38, %c0_39, %c0_40], %58 {strides = array<i32>} : memref<1x3x2x128xf32, #tpu.memory_space<vmem>>, vector<1x1x2x128xf32>,
    %c1_41 = arith.constant 1 : index
    %59 = memref.load %arg3[%c1_41] : memref<3xf32, #tpu.memory_space<smem>>
    %60 = vector.broadcast %59 : f32 to vector<2x128xf32>
    %61 = arith.addf %48, %60 : vector<2x128xf32>
    %c0_42 = arith.constant 0 : index
    %c1_43 = arith.constant 1 : index
    %c0_44 = arith.constant 0 : index
    %c0_45 = arith.constant 0 : index
    %62 = vector.load %arg5[%c0_42, %c1_43, %c0_44, %c0_45] : memref<1x3x2x128xf32, #tpu.memory_space<vmem>>, vector<1x1x2x128xf32>
    %63 = vector.shape_cast %62 : vector<1x1x2x128xf32> to vector<2x128xf32>
    %64 = vector.shape_cast %61 : vector<2x128xf32> to vector<1x1x2x128xf32>
    tpu.vector_store %arg5[%c0_42, %c1_43, %c0_44, %c0_45], %64 {strides = array<i32>} : memref<1x3x2x128xf32, #tpu.memory_space<vmem>>, vector<1x1x2x128xf32>,
    %c2_46 = arith.constant 2 : index
    %65 = memref.load %arg3[%c2_46] : memref<3xf32, #tpu.memory_space<smem>>
    %66 = vector.broadcast %65 : f32 to vector<2x128xf32>
    %67 = arith.addf %52, %66 : vector<2x128xf32>
    %c0_47 = arith.constant 0 : index
    %c2_48 = arith.constant 2 : index
    %c0_49 = arith.constant 0 : index
    %c0_50 = arith.constant 0 : index
    %68 = vector.load %arg5[%c0_47, %c2_48, %c0_49, %c0_50] : memref<1x3x2x128xf32, #tpu.memory_space<vmem>>, vector<1x1x2x128xf32>
    %69 = vector.shape_cast %68 : vector<1x1x2x128xf32> to vector<2x128xf32>
    %70 = vector.shape_cast %67 : vector<2x128xf32> to vector<1x1x2x128xf32>
    tpu.vector_store %arg5[%c0_47, %c2_48, %c0_49, %c0_50], %70 {strides = array<i32>} : memref<1x3x2x128xf32, #tpu.memory_space<vmem>>, vector<1x1x2x128xf32>,
    return
  }
  func.func @transform_0(%arg0: i32, %arg1: i32) -> (i32, i32) {
    %c0_i32 = arith.constant 0 : i32
    %c0_i32_0 = arith.constant 0 : i32
    %c0_i32_1 = arith.constant 0 : i32
    return %c0_i32, %c0_i32_0 : i32, i32
  }
  func.func @transform_1(%arg0: i32, %arg1: i32) -> i32 {
    %c0_i32 = arith.constant 0 : i32
    %c0_i32_0 = arith.constant 0 : i32
    return %c0_i32 : i32
  }
  func.func @transform_2(%arg0: i32, %arg1: i32) -> (i32, i32, i32, i32) {
    %c0_i32 = arith.constant 0 : i32
    %c0_i32_0 = arith.constant 0 : i32
    %c0_i32_1 = arith.constant 0 : i32
    return %arg0, %c0_i32, %arg1, %c0_i32_0 : i32, i32, i32, i32
  }
  func.func @transform_3(%arg0: i32, %arg1: i32) -> (i32, i32, i32, i32) {
    %c0_i32 = arith.constant 0 : i32
    %c0_i32_0 = arith.constant 0 : i32
    %c0_i32_1 = arith.constant 0 : i32
    return %arg0, %c0_i32, %arg1, %c0_i32_0 : i32, i32, i32, i32
  }
}

</mosaic_0001>

<llo_original>
// kernel: tpu_custom_call.1
$region0: #{tpu_custom_call.1}
  #allocation0 [shape = 'u32[]', space=smem, size = 0x4, offset = 0x4, fixed_abs, tag = 'smem constant byte address 0x4 - core index']
  #allocation1 [shape = 'u32[144,128]{1,0:T(1,128)}', space=vmem, size = 0x12000, scoped, tag = 'internal scratch']
  %s0 = inlined_call_operand.hbm [shape: f32[3,4], index: 0, kind: input, shape index: {}]
  %s1 = inlined_call_operand.vmem [shape: f32[3], index: 1, kind: input, shape index: {}]
  %s2 = inlined_call_operand.hbm [shape: f32[2,4,2,128], index: 2, kind: input, shape index: {}]
  %s3 = inlined_call_operand.hbm [shape: f32[2,3,2,128], index: 3, kind: output, shape index: {}]
  %s4 = sld [smem:[#allocation0]]
  $region57: #{tpu_custom_call.1} parent=0
    _
  %s6 = ssub.s32 1, %s4
  %s7 = scalar_select 0, %s6, %s4
  $region1: #{tpu_custom_call.1} parent=0
    #allocation2 [shape = 'u8[2048]{0}', space=smem, size = 0x800, scoped, tag = 'input window, operand 0, single buffered']
    #allocation3 [shape = 's32[2]{0}', space=sflag, size = 0x8, scoped, tag = 'scoped memory for tpu_custom_call.1']
    #allocation4 [shape = 's32[2]{0}', space=sflag, size = 0x8, scoped, tag = 'scoped memory for tpu_custom_call.1']
    #allocation5 [shape = 's32[2]{0}', space=sflag, size = 0x8, scoped, tag = 'scoped memory for tpu_custom_call.1']
    #allocation6 [shape = 's32[2]{0}', space=sflag, size = 0x8, scoped, tag = 'scoped memory for tpu_custom_call.1']
    #allocation7 [shape = 'u8[512]{0}', space=smem, size = 0x200, scoped, tag = 'input window, operand 1, single buffered']
    #allocation8 [shape = 'u8[8192]{0}', space=vmem, size = 0x2000, scoped, tag = 'input window, operand 2']
    #allocation9 [shape = 'u8[6144]{0}', space=vmem, size = 0x1800, scoped, tag = 'output window, operand 0']
    %8 = vsyncpa [#allocation5], 0
    %9 = vsyncpa [#allocation6], 0
    %10 = vsyncpa [#allocation3], 0
    %s11 = scalar_lea.sflag [#allocation3], 1
    %12 = vsyncpa %s11, 0
    %13 = vsyncpa [#allocation4], 0
    %s14 = scalar_lea.sflag [#allocation4], 1
    %15 = vsyncpa %s14, 0
    loop: start=0, step=1, limit=4
    $region2: #{tpu_custom_call.1} parent=1 // loop_pre_header
      _
    $region3: #{tpu_custom_call.1} parent=1 // loop_header
      %s17 = sphi 0, %s21
      %p18 = scmp.ge.s32.totalorder %s17, 4
      %s24 = sphi 0, %s36
      %s25 = sphi 0, %s32
      %s26 = sphi 0, %s24
      %s27 = sphi 0, %s25
      %s28 = sphi 0, %s26
      %s29 = sphi 0, %s27
      %s37 = sphi 0, %s37
      %s39 = sphi 0, %s37
      %s40 = sphi 0, %s39
      %s54 = sphi 0, %s40
      %s58 = sphi 0, %s58
      %s60 = sphi 0, %s58
      %s61 = sphi 0, %s60
      %s75 = sphi 0, %s61
      %s83 = sphi 0, %s85
      %s86 = sphi 0, %s83
      %s87 = sphi 0, %s86
      %s103 = sphi 0, %s87
      %s111 = sphi 0, %s113
      %s114 = sphi 0, %s111
      %s115 = sphi 0, %s114
      %s131 = sphi 0, %s115
    $region4: #{tpu_custom_call.1} parent=1 // loop_header_branch
      %20 = sbr.rel (%p18) target = $region8
    $region5: #{tpu_custom_call.1} parent=1 // loop_body
      %s22 = ssub.s32 %s17, 1
      %s23 = ssub.s32 %s17, 2
      %s30 = sadd.s32 1, %s25
      %p31 = scmp.ge.s32.totalorder %s30, 1
      %s32 = scalar_select %p31, 0, %s30
      %s33 = sadd.s32 1, %s24
      %s34 = scalar_select %p31, %s33, %s24
      %p35 = scmp.ge.s32.totalorder %s34, 2
      %s36 = scalar_select %p35, 0, %s34
      %s38 = sadd.s32 %s37, 1
      %p41 = scmp.eq.s32.totalorder %s17, 1
      %p42 = scmp.ne.s32.totalorder %s37, %s39
      %p43 = scmp.eq.s32.totalorder %s17, 0
      %p44 = por %p42, %p43
      %p45 = scmp.ne.s32.totalorder %s37, %s39
      %p46 = scmp.eq.s32.totalorder %s22, 1
      %p47 = por %p45, %p46
      %p48 = scmp.ne.s32.totalorder %s39, %s40
      %p49 = scmp.eq.s32.totalorder %s22, 0
      %p50 = por %p48, %p49
      %p51 = scmp.ne.s32.totalorder %s39, %s40
      %p52 = scmp.eq.s32.totalorder %s23, 1
      %p53 = por %p51, %p52
      %p55 = scmp.ne.s32.totalorder %s40, %s54
      %p56 = scmp.eq.s32.totalorder %s23, 0
      %p57 = por %p55, %p56
      %s59 = sadd.s32 %s58, 1
      %p62 = scmp.eq.s32.totalorder %s17, 1
      %p63 = scmp.ne.s32.totalorder %s58, %s60
      %p64 = scmp.eq.s32.totalorder %s17, 0
      %p65 = por %p63, %p64
      %p66 = scmp.ne.s32.totalorder %s58, %s60
      %p67 = scmp.eq.s32.totalorder %s22, 1
      %p68 = por %p66, %p67
      %p69 = scmp.ne.s32.totalorder %s60, %s61
      %p70 = scmp.eq.s32.totalorder %s22, 0
      %p71 = por %p69, %p70
      %p72 = scmp.ne.s32.totalorder %s60, %s61
      %p73 = scmp.eq.s32.totalorder %s23, 1
      %p74 = por %p72, %p73
      %p76 = scmp.ne.s32.totalorder %s61, %s75
      %p77 = scmp.eq.s32.totalorder %s23, 0
      %p78 = por %p76, %p77
      %s79 = ssub.s32 %s24, %s36
      %s80 = ssub.s32 %s25, %s32
      %s81 = sor.u32 %s79, %s80
      %p82 = scmp.eq.s32.totalorder %s81, 0
      %s84 = sadd.s32 %s83, 1
      %s85 = scalar_select %p82, %s83, %s84
      %p88 = pneg %p82
      %p89 = scmp.eq.s32.totalorder %s17, 1
      %p90 = por %p88, %p89
      %p91 = scmp.ne.s32.totalorder %s83, %s86
      %p92 = scmp.eq.s32.totalorder %s17, 0
      %p93 = por %p91, %p92
      %p94 = scmp.ne.s32.totalorder %s83, %s86
      %p95 = scmp.eq.s32.totalorder %s22, 1
      %p96 = por %p94, %p95
      %p97 = scmp.ne.s32.totalorder %s86, %s87
      %p98 = scmp.eq.s32.totalorder %s22, 0
      %p99 = por %p97, %p98
      %p100 = scmp.ne.s32.totalorder %s86, %s87
      %p101 = scmp.eq.s32.totalorder %s23, 1
      %p102 = por %p100, %p101
      %p104 = scmp.ne.s32.totalorder %s87, %s103
      %p105 = scmp.eq.s32.totalorder %s23, 0
      %p106 = por %p104, %p105
      %s107 = ssub.s32 %s24, %s36
      %s108 = ssub.s32 %s25, %s32
      %s109 = sor.u32 %s107, %s108
      %p110 = scmp.eq.s32.totalorder %s109, 0
      %s112 = sadd.s32 %s111, 1
      %s113 = scalar_select %p110, %s111, %s112
      %p116 = pneg %p110
      %p117 = scmp.eq.s32.totalorder %s17, 1
      %p118 = por %p116, %p117
      %p119 = scmp.ne.s32.totalorder %s111, %s114
      %p120 = scmp.eq.s32.totalorder %s17, 0
      %p121 = por %p119, %p120
      %p122 = scmp.ne.s32.totalorder %s111, %s114
      %p123 = scmp.eq.s32.totalorder %s22, 1
      %p124 = por %p122, %p123
      %p125 = scmp.ne.s32.totalorder %s114, %s115
      %p126 = scmp.eq.s32.totalorder %s22, 0
      %p127 = por %p125, %p126
      %p128 = scmp.ne.s32.totalorder %s114, %s115
      %p129 = scmp.eq.s32.totalorder %s23, 1
      %p130 = por %p128, %p129
      %p132 = scmp.ne.s32.totalorder %s115, %s131
      %p133 = scmp.eq.s32.totalorder %s23, 0
      %p134 = por %p132, %p133
      %p135 = scmp.le.s32.totalorder 1, %s17
      %p136 = scmp.lt.s32.totalorder %s17, 3
      %p137 = pnand %p135, %p136
      %p138 = pneg %p137
      // Predicated region
      $region9: #{tpu_custom_call.1} parent=5 // pred_check
        _
      $region10: #{tpu_custom_call.1} parent=5 // pred_check_branch
        %140 = sbr.rel (%p137) target = $region12
      $region11: #{tpu_custom_call.1} parent=5 // pred_region
        %s141 = ssub.s32 %s17, 1
        // Predicated region
        $region13: #{tpu_custom_call.1} parent=11 // pred_check
          %p142 = pneg %p50
        $region14: #{tpu_custom_call.1} parent=11 // pred_check_branch
          %144 = sbr.rel (%p142) target = $region16
        $region15: #{tpu_custom_call.1} parent=11 // pred_region
          %s146 = ssub.s32 64, 64
          %147 = vsyncadd [#allocation5], %s146
          %150 = dma.hbm_to_smem %s0, 64, [#allocation2], [#allocation5]
        $region16: #{tpu_custom_call.1} parent=11 // pred_fallthru
          _
        // Predicated region
        $region17: #{tpu_custom_call.1} parent=11 // pred_check
          %p151 = pneg %p71
        $region18: #{tpu_custom_call.1} parent=11 // pred_check_branch
          %153 = sbr.rel (%p151) target = $region20
        $region19: #{tpu_custom_call.1} parent=11 // pred_region
          %s155 = ssub.s32 16, 16
          %156 = vsyncadd [#allocation6], %s155
          %s158 = sshll.u32 %s1, 4
          %s159 = int_to_ptr.vmem [resolvable:$true] %s158
          %161 = dma.vmem_to_smem %s159, 16, [#allocation7], [#allocation6]
        $region20: #{tpu_custom_call.1} parent=11 // pred_fallthru
          _
      $region12: #{tpu_custom_call.1} parent=5 // pred_fallthru
        _
      %p162 = scmp.lt.s32.totalorder %s17, 2
      // Predicated region
      $region21: #{tpu_custom_call.1} parent=5 // pred_check
        %p163 = pneg %p162
      $region22: #{tpu_custom_call.1} parent=5 // pred_check_branch
        %165 = sbr.rel (%p163) target = $region24
      $region23: #{tpu_custom_call.1} parent=5 // pred_region
        // Predicated region
        $region25: #{tpu_custom_call.1} parent=23 // pred_check
          %p166 = pneg %p93
        $region26: #{tpu_custom_call.1} parent=23 // pred_check_branch
          %168 = sbr.rel (%p166) target = $region28
        $region27: #{tpu_custom_call.1} parent=23 // pred_region
          %s169 = sand.u32 %s83, 1
          %s170 = scalar_lea.sflag [#allocation3], %s169
          %s171 = sand.u32 %s83, 1
          %s172 = smul.addr %s171, 8
          %s173 = scalar_lea.vmem [#allocation8], %s172
          %s175 = ssub.s32 128, 128
          %176 = vsyncadd %s170, %s175
          %s177 = smul.addr %s24, 4
          %s178 = sadd.s32 %s25, %s177
          %s179 = smul.addr %s178, 32
          %s180 = scalar_lea.hbm %s2, %s179
          %s181 = sshll.u32 %s173, 4
          %s182 = int_to_ptr.vmem [resolvable:$true] %s181
          %187 = dma.hbm_to_vmem [thread:$0]  %s180, 128, %s182, %s170, 32, 32, 2
        $region28: #{tpu_custom_call.1} parent=23 // pred_fallthru
          _
      $region24: #{tpu_custom_call.1} parent=5 // pred_fallthru
        _
      %p188 = scmp.le.s32.totalorder 1, %s17
      %p189 = scmp.lt.s32.totalorder %s17, 3
      %p190 = pnand %p188, %p189
      %p191 = pneg %p190
      // Predicated region
      $region29: #{tpu_custom_call.1} parent=5 // pred_check
        _
      $region30: #{tpu_custom_call.1} parent=5 // pred_check_branch
        %193 = sbr.rel (%p190) target = $region32
      $region31: #{tpu_custom_call.1} parent=5 // pred_region
        %s194 = ssub.s32 %s17, 1
        // Predicated region
        $region33: #{tpu_custom_call.1} parent=31 // pred_check
          %p195 = pneg %p50
        $region34: #{tpu_custom_call.1} parent=31 // pred_check_branch
          %197 = sbr.rel (%p195) target = $region36
        $region35: #{tpu_custom_call.1} parent=31 // pred_region
          %198 = dma.done [#allocation5], 64
        $region36: #{tpu_custom_call.1} parent=31 // pred_fallthru
          _
        // Predicated region
        $region37: #{tpu_custom_call.1} parent=31 // pred_check
          %p199 = pneg %p71
        $region38: #{tpu_custom_call.1} parent=31 // pred_check_branch
          %201 = sbr.rel (%p199) target = $region40
        $region39: #{tpu_custom_call.1} parent=31 // pred_region
          %202 = dma.done [#allocation6], 16
        $region40: #{tpu_custom_call.1} parent=31 // pred_fallthru
          _
        %s203 = sand.u32 %s86, 1
        %s204 = scalar_lea.sflag [#allocation3], %s203
        %s205 = sand.u32 %s86, 1
        %s206 = smul.addr %s205, 8
        %s207 = scalar_lea.vmem [#allocation8], %s206
        // Predicated region
        $region41: #{tpu_custom_call.1} parent=31 // pred_check
          %p208 = pneg %p99
        $region42: #{tpu_custom_call.1} parent=31 // pred_check_branch
          %210 = sbr.rel (%p208) target = $region44
        $region43: #{tpu_custom_call.1} parent=31 // pred_region
          %211 = dma.done %s204, 128
        $region44: #{tpu_custom_call.1} parent=31 // pred_fallthru
          _
        %212 = sfence
        %p213 = pneg %p50
        %p214 = pneg %p47
        %p215 = pneg %p71
        %p216 = pneg %p68
        %s217 = sand.u32 %s86, 1
        %s218 = scalar_lea.sflag [#allocation3], %s217
        %s219 = sand.u32 %s86, 1
        %s220 = smul.addr %s219, 8
        %s221 = scalar_lea.vmem [#allocation8], %s220
        %p222 = pneg %p99
        %p223 = pneg %p96
        %p224 = pneg %p127
        %p225 = pneg %p124
        %s226 = sand.u32 %s114, 1
        %s227 = scalar_lea.sflag [#allocation4], %s226
        %s228 = sand.u32 %s114, 1
        %s229 = smul.addr %s228, 6
        %s230 = scalar_lea.vmem [#allocation9], %s229
        %v231 = vld [vmem:[%s207] sm:$0x3]
        %s232 = sld [smem:[#allocation2]]
        %v233 = vstv %s232
        %v234 = vmul.f32 %v233, %v231
        %s235 = sld [smem:[#allocation2 + $0x80]]
        %v236 = vstv %s235
        %v237 = vmul.f32 %v236, %v231
        %s238 = sld [smem:[#allocation2 + $0x100]]
        %v239 = vstv %s238
        %v240 = vmul.f32 %v239, %v231
        %s241 = scalar_lea.vmem %s207, 2 [#allocation8]
        %v242 = vld [vmem:[%s241] sm:$0x3]
        %s243 = sld [smem:[#allocation2 + $0x1]]
        %v244 = vstv %s243
        %v245 = vmul.f32 %v244, %v242
        %v246 = vadd.f32 %v234, %v245
        %s247 = sld [smem:[#allocation2 + $0x81]]
        %v248 = vstv %s247
        %v249 = vmul.f32 %v248, %v242
        %v250 = vadd.f32 %v237, %v249
        %s251 = sld [smem:[#allocation2 + $0x101]]
        %v252 = vstv %s251
        %v253 = vmul.f32 %v252, %v242
        %v254 = vadd.f32 %v240, %v253
        %s255 = scalar_lea.vmem %s207, 4 [#allocation8]
        %v256 = vld [vmem:[%s255] sm:$0x3]
        %s257 = sld [smem:[#allocation2 + $0x2]]
        %v258 = vstv %s257
        %v259 = vmul.f32 %v258, %v256
        %v260 = vadd.f32 %v246, %v259
        %s261 = sld [smem:[#allocation2 + $0x82]]
        %v262 = vstv %s261
        %v263 = vmul.f32 %v262, %v256
        %v264 = vadd.f32 %v250, %v263
        %s265 = sld [smem:[#allocation2 + $0x102]]
        %v266 = vstv %s265
        %v267 = vmul.f32 %v266, %v256
        %v268 = vadd.f32 %v254, %v267
        %s269 = scalar_lea.vmem %s207, 6 [#allocation8]
        %v270 = vld [vmem:[%s269] sm:$0x3]
        %s271 = sld [smem:[#allocation2 + $0x3]]
        %v272 = vstv %s271
        %v273 = vmul.f32 %v272, %v270
        %v274 = vadd.f32 %v260, %v273
        %s275 = sld [smem:[#allocation2 + $0x83]]
        %v276 = vstv %s275
        %v277 = vmul.f32 %v276, %v270
        %v278 = vadd.f32 %v264, %v277
        %s279 = sld [smem:[#allocation2 + $0x103]]
        %v280 = vstv %s279
        %v281 = vmul.f32 %v280, %v270
        %v282 = vadd.f32 %v268, %v281
        %s283 = sld [smem:[#allocation7]]
        %v284 = vstv %s283
        %v285 = vadd.f32 %v274, %v284
        %286 = vst [vmem:[%s230] sm:$0x3] %v285
        %s287 = sld [smem:[#allocation7 + $0x1]]
        %v288 = vstv %s287
        %v289 = vadd.f32 %v278, %v288
        %s290 = scalar_lea.vmem %s230, 2 [#allocation9]
        %291 = vst [vmem:[%s290] sm:$0x3] %v289
        %s292 = sld [smem:[#allocation7 + $0x2]]
        %v293 = vstv %s292
        %v294 = vadd.f32 %v282, %v293
        %s295 = scalar_lea.vmem %s230, 4 [#allocation9]
        %296 = vst [vmem:[%s295] sm:$0x3] %v294
        %s297 = sand.u32 %s114, 1
        %s298 = scalar_lea.sflag [#allocation4], %s297
        %s299 = sand.u32 %s114, 1
        %s300 = smul.addr %s299, 6
        %s301 = scalar_lea.vmem [#allocation9], %s300
        // Predicated region
        $region45: #{tpu_custom_call.1} parent=31 // pred_check
          %p302 = pneg %p124
        $region46: #{tpu_custom_call.1} parent=31 // pred_check_branch
          %304 = sbr.rel (%p302) target = $region48
        $region47: #{tpu_custom_call.1} parent=31 // pred_region
          %s306 = ssub.s32 96, 96
          %307 = vsyncadd %s298, %s306
          %s308 = smul.addr %s26, 3
          %s309 = sadd.s32 %s27, %s308
          %s310 = smul.addr %s309, 32
          %s311 = scalar_lea.hbm %s3, %s310
          %s312 = sshll.u32 %s301, 4
          %s313 = int_to_ptr.vmem [resolvable:$true] %s312
          %318 = dma.vmem_to_hbm [thread:$0]  %s313, 96, %s311, %s298, 32, 32, 2
        $region48: #{tpu_custom_call.1} parent=31 // pred_fallthru
          _
      $region32: #{tpu_custom_call.1} parent=5 // pred_fallthru
        _
      %p319 = scmp.le.s32.totalorder 2, %s17
      // Predicated region
      $region49: #{tpu_custom_call.1} parent=5 // pred_check
        %p320 = pneg %p319
      $region50: #{tpu_custom_call.1} parent=5 // pred_check_branch
        %322 = sbr.rel (%p320) target = $region52
      $region51: #{tpu_custom_call.1} parent=5 // pred_region
        %s323 = ssub.s32 %s17, 2
        // Predicated region
        $region53: #{tpu_custom_call.1} parent=51 // pred_check
          %p324 = pneg %p130
        $region54: #{tpu_custom_call.1} parent=51 // pred_check_branch
          %326 = sbr.rel (%p324) target = $region56
        $region55: #{tpu_custom_call.1} parent=51 // pred_region
          %s327 = sand.u32 %s115, 1
          %s328 = scalar_lea.sflag [#allocation4], %s327
          %s329 = sand.u32 %s115, 1
          %s330 = smul.addr %s329, 6
          %s331 = scalar_lea.vmem [#allocation9], %s330
          %332 = dma.done %s328, 96
        $region56: #{tpu_custom_call.1} parent=51 // pred_fallthru
          _
      $region52: #{tpu_custom_call.1} parent=5 // pred_fallthru
        _
    $region6: #{tpu_custom_call.1} parent=1 // loop_footer
      %s21 = sadd.s32 1, %s17
    $region7: #{tpu_custom_call.1} parent=1 // loop_footer_branch
      %16 = sbr.rel target = $region3
    $region8: #{tpu_custom_call.1} parent=1 // loop_exit
      _
    %333 = vsyncpa [#allocation3], 1
    %s334 = scalar_lea.sflag [#allocation3], 1
    %335 = vsyncpa %s334, 1
    %336 = vsyncpa [#allocation4], 1
    %s337 = scalar_lea.sflag [#allocation4], 1
    %338 = vsyncpa %s337, 1
    %339 = vsyncpa [#allocation5], 1
    %s340 = scalar_lea.sflag [#allocation5], 1
    %341 = vsyncpa %s340, 1
    %342 = vsyncpa [#allocation6], 1
    %s343 = scalar_lea.sflag [#allocation6], 1
    %344 = vsyncpa %s343, 1

</llo_original>
